<compile_context>
chip_gen: v5e
topology: v5e:2x2
jax: 0.10.0
libtpu: 0.0.40
codegen_flags: <defaults>
</compile_context>

<pallas_src>
import jax
import jax.numpy as jnp
from jax import lax
from jax.experimental import pallas as pl
from jax.experimental.pallas import tpu as pltpu


def cam_attn_kernel(x_ref, attn_ref, energy_acc):
    """Pass 1: accumulate energy over HW tiles; softmax at the last tile."""
    k = pl.program_id(1)

    @pl.when(k == 0)
    def _init():
        energy_acc[...] = jnp.zeros_like(energy_acc)

    x = x_ref[0]                                            # (C, tHW), input dtype
    # energy += x @ x^T  (contract spatial dim), exact f32 accumulation on MXU.
    energy_acc[...] += lax.dot_general(
        x, x, (((1,), (1,)), ((), ())),
        preferred_element_type=jnp.float32,
        precision=lax.Precision.HIGHEST)                    # (C, C)

    @pl.when(k == pl.num_programs(1) - 1)
    def _finalize():
        energy = energy_acc[...]
        # softmax(rowmax(E) - E) == exp(rowmin(E) - E) / sum(...)  (exponent <= 0)
        e_min = jnp.min(energy, axis=-1, keepdims=True)     # (C, 1)
        ex = jnp.exp(e_min - energy)                        # (C, C)
        denom = jnp.sum(ex, axis=-1, keepdims=True)
        attn_ref[0] = (ex / denom).astype(attn_ref.dtype)


def cam_out_kernel(gamma_ref, attn_ref, x_ref, o_ref):
    """Pass 2: out = gamma * (attn @ x) + x for one HW tile."""
    gamma = gamma_ref[0]                                    # scalar from SMEM
    x = x_ref[0]                                            # (C, tHW), input dtype
    attn = attn_ref[0].astype(x.dtype)                      # (C, C)
    out = jnp.dot(attn, x,
                  preferred_element_type=jnp.float32,
                  precision=lax.Precision.HIGHEST)
    o_ref[0] = (gamma * out + x.astype(jnp.float32)).astype(o_ref.dtype)


def cam_module(x, gamma, *, max_tile_bytes=4 << 20):
    """x: (B, C, H, W), gamma: scalar parameter. Returns (B, C, H, W)."""
    B, C, H, W = x.shape
    HW = H * W
    dtype = x.dtype
    itemsize = jnp.dtype(dtype).itemsize

    # --- choose a lane-aligned HW tile that fits the per-buffer VMEM budget ---
    lane = 128
    hw_lane = ((HW + lane - 1) // lane) * lane
    max_thw = max(lane, (max_tile_bytes // max(C * itemsize, 1)) // lane * lane)
    thw = min(hw_lane, max_thw)
    hw_pad = ((HW + thw - 1) // thw) * thw                  # multiple of thw (and 128)
    n_hw = hw_pad // thw

    x_flat = x.reshape(B, C, HW)
    if hw_pad != HW:
        x_flat = jnp.pad(x_flat, ((0, 0), (0, 0), (0, hw_pad - HW)))

    gamma_arr = jnp.asarray(gamma, dtype=jnp.float32).reshape(1)

    # --- explicit VMEM limit from tile sizes (double-buffered ins/outs + scratch) ---
    xblk = C * thw * itemsize
    attn_bytes = C * C * 4
    est1 = 2 * xblk + attn_bytes + 2 * attn_bytes
    est2 = 2 * attn_bytes + 2 * xblk + 2 * C * thw * itemsize
    vmem_limit = int(min(max(max(est1, est2) + (8 << 20), 24 << 20), 48 << 20))

    # ---------------- pass 1: channel attention (B, C, C) ----------------
    attn = pl.pallas_call(
        cam_attn_kernel,
        out_shape=jax.ShapeDtypeStruct((B, C, C), jnp.float32),
        grid_spec=pltpu.PrefetchScalarGridSpec(
            num_scalar_prefetch=0,
            grid=(B, n_hw),
            in_specs=[
                pl.BlockSpec((1, C, thw), lambda b, k: (b, 0, k)),   # x tile
            ],
            out_specs=pl.BlockSpec((1, C, C), lambda b, k: (b, 0, 0)),
            scratch_shapes=[pltpu.VMEM((C, C), jnp.float32)],
        ),
        compiler_params=pltpu.CompilerParams(
            dimension_semantics=("parallel", "arbitrary"),
            vmem_limit_bytes=vmem_limit),
    )(x_flat)

    # ---------------- pass 2: out = gamma * (attn @ x) + x ----------------
    # TODO(synk): optionally add a channel-row ("parallel") grid axis for v7x
    # megacore balance when B == 1; omitted to keep the (C, C) attn block whole.
    out_flat = pl.pallas_call(
        cam_out_kernel,
        out_shape=jax.ShapeDtypeStruct((B, C, hw_pad), dtype),
        grid_spec=pltpu.PrefetchScalarGridSpec(
            num_scalar_prefetch=0,
            grid=(B, n_hw),
            in_specs=[
                pl.BlockSpec(memory_space=pltpu.MemorySpace.SMEM),   # gamma scalar
                pl.BlockSpec((1, C, C), lambda b, k: (b, 0, 0)),     # attention
                pl.BlockSpec((1, C, thw), lambda b, k: (b, 0, k)),   # x tile
            ],
            out_specs=pl.BlockSpec((1, C, thw), lambda b, k: (b, 0, k)),
        ),
        compiler_params=pltpu.CompilerParams(
            dimension_semantics=("parallel", "parallel"),
            vmem_limit_bytes=vmem_limit),
    )(gamma_arr, attn, x_flat)

    return out_flat[:, :, :HW].reshape(B, C, H, W)


def cam_reference(x, gamma):
    """Pure-JAX reference mirroring the PyTorch forward (f32, exact matmuls)."""
    B, C, H, W = x.shape
    q = x.reshape(B, C, H * W).astype(jnp.float32)
    energy = jnp.einsum("bcn,bdn->bcd", q, q, precision="highest")
    energy_new = jnp.max(energy, axis=-1, keepdims=True) - energy
    attn = jax.nn.softmax(energy_new, axis=-1)
    out = jnp.einsum("bcd,bdn->bcn", attn, q,
                     precision="highest").reshape(B, C, H, W)
    return gamma * out + x.astype(jnp.float32)


if __name__ == "__main__":
    key = jax.random.PRNGKey(0)
    B, C, H, W = 2, 4, 16, 16
    x = jax.random.normal(key, (B, C, H, W), dtype=jnp.float32)

    # nn.Parameter(torch.zeros(1)) -> gamma initialized to 0 (deterministic).
    # Also exercise a nonzero gamma.
    for gamma in (0.0, 0.5):
        out = cam_module(x, gamma)
        out = jax.block_until_ready(out)
        ref = cam_reference(x, gamma)
        assert out.shape == (B, C, H, W)
        assert jnp.allclose(out, ref, atol=1e-3, rtol=1e-3), (
            f"mismatch: max abs err {jnp.max(jnp.abs(out - ref))}")

    print("KERNEL_OK")
</pallas_src>

<mosaic_0001>
module attributes {stable_mosaic.version = 11 : i64} {
  func.func @cam_attn_kernel(%arg0: i32, %arg1: i32, %arg2: memref<1x4x256xf32, #tpu.memory_space<vmem>>, %arg3: memref<1x4x4xf32, #tpu.memory_space<vmem>>, %arg4: memref<4x4xf32, #tpu.memory_space<vmem>>) attributes {dimension_semantics = [#tpu.dimension_semantics<parallel>, #tpu.dimension_semantics<arbitrary>], iteration_bounds = array<i64: 2, 1>, scalar_prefetch = 0 : i64, scratch_operands = 1 : i64, tpu.core_type = #tpu.core_type<tc>, window_params = [{transform_indices = @transform_0, window_bounds = array<i64: 1, 4, 256>}, {transform_indices = @transform_1, window_bounds = array<i64: 1, 4, 4>}]} {
    %c0_i32 = arith.constant 0 : i32
    %0 = arith.cmpi eq, %arg1, %c0_i32 : i32
    %1 = arith.extui %0 : i1 to i32
    %c0_i32_0 = arith.constant 0 : i32
    %2 = arith.cmpi ne, %1, %c0_i32_0 : i32
    scf.if %2 {
      %cst_9 = arith.constant 0.000000e+00 : f32
      %12 = vector.broadcast %cst_9 : f32 to vector<4x4xf32>
      %c0_10 = arith.constant 0 : index
      %c0_11 = arith.constant 0 : index
      %13 = vector.load %arg4[%c0_10, %c0_11] : memref<4x4xf32, #tpu.memory_space<vmem>>, vector<4x4xf32>
      tpu.vector_store %arg4[%c0_10, %c0_11], %12 {strides = array<i32>} : memref<4x4xf32, #tpu.memory_space<vmem>>, vector<4x4xf32>,
    } else {
    }
    %c0 = arith.constant 0 : index
    %c0_1 = arith.constant 0 : index
    %c0_2 = arith.constant 0 : index
    %3 = vector.load %arg2[%c0, %c0_1, %c0_2] : memref<1x4x256xf32, #tpu.memory_space<vmem>>, vector<1x4x256xf32>
    %4 = vector.shape_cast %3 : vector<1x4x256xf32> to vector<4x256xf32>
    %c0_3 = arith.constant 0 : index
    %c0_4 = arith.constant 0 : index
    %5 = vector.load %arg4[%c0_3, %c0_4] : memref<4x4xf32, #tpu.memory_space<vmem>>, vector<4x4xf32>
    %cst = arith.constant dense<0.000000e+00> : vector<4x4xf32>
    %6 = tpu.matmul %4, %4, %cst {dimension_numbers = #tpu.dot_dimension_numbers<[1], [1], [0], [0], [0, 0, 1, 0], [], []>, precision = #tpu.contract_precision<fp32>} : vector<4x256xf32>, vector<4x256xf32>, vector<4x4xf32> -> vector<4x4xf32>
    %7 = arith.addf %5, %6 : vector<4x4xf32>
    %c0_5 = arith.constant 0 : index
    %c0_6 = arith.constant 0 : index
    %8 = vector.load %arg4[%c0_5, %c0_6] : memref<4x4xf32, #tpu.memory_space<vmem>>, vector<4x4xf32>
    tpu.vector_store %arg4[%c0_5, %c0_6], %7 {strides = array<i32>} : memref<4x4xf32, #tpu.memory_space<vmem>>, vector<4x4xf32>,
    %c0_i32_7 = arith.constant 0 : i32
    %9 = arith.cmpi eq, %arg1, %c0_i32_7 : i32
    %10 = arith.extui %9 : i1 to i32
    %c0_i32_8 = arith.constant 0 : i32
    %11 = arith.cmpi ne, %10, %c0_i32_8 : i32
    scf.if %11 {
      %c0_9 = arith.constant 0 : index
      %c0_10 = arith.constant 0 : index
      %12 = vector.load %arg4[%c0_9, %c0_10] : memref<4x4xf32, #tpu.memory_space<vmem>>, vector<4x4xf32>
      %cst_11 = arith.constant dense<0x7F800000> : vector<4xf32>
      %13 = vector.multi_reduction <minimumf>, %12, %cst_11 [1] : vector<4x4xf32> to vector<4xf32>
      %14 = vector.shape_cast %13 : vector<4xf32> to vector<4x1xf32>
      %15 = vector.broadcast %14 : vector<4x1xf32> to vector<4x4xf32>
      %16 = arith.subf %15, %12 : vector<4x4xf32>
      %17 = math.exp %16 : vector<4x4xf32>
      %cst_12 = arith.constant dense<0.000000e+00> : vector<4xf32>
      %18 = vector.multi_reduction <add>, %17, %cst_12 [1] : vector<4x4xf32> to vector<4xf32>
      %19 = vector.shape_cast %18 : vector<4xf32> to vector<4x1xf32>
      %20 = vector.broadcast %19 : vector<4x1xf32> to vector<4x4xf32>
      %21 = arith.divf %17, %20 : vector<4x4xf32>
      %c0_13 = arith.constant 0 : index
      %c0_14 = arith.constant 0 : index
      %c0_15 = arith.constant 0 : index
      %22 = vector.load %arg3[%c0_13, %c0_14, %c0_15] : memref<1x4x4xf32, #tpu.memory_space<vmem>>, vector<1x4x4xf32>
      %23 = vector.shape_cast %22 : vector<1x4x4xf32> to vector<4x4xf32>
      %24 = vector.shape_cast %21 : vector<4x4xf32> to vector<1x4x4xf32>
      tpu.vector_store %arg3[%c0_13, %c0_14, %c0_15], %24 {strides = array<i32>} : memref<1x4x4xf32, #tpu.memory_space<vmem>>, vector<1x4x4xf32>,
    } else {
    }
    return
  }
  func.func @transform_0(%arg0: i32, %arg1: i32) -> (i32, i32, i32) {
    %c0_i32 = arith.constant 0 : i32
    %c0_i32_0 = arith.constant 0 : i32
    return %arg0, %c0_i32, %arg1 : i32, i32, i32
  }
  func.func @transform_1(%arg0: i32, %arg1: i32) -> (i32, i32, i32) {
    %c0_i32 = arith.constant 0 : i32
    %c0_i32_0 = arith.constant 0 : i32
    %c0_i32_1 = arith.constant 0 : i32
    return %arg0, %c0_i32, %c0_i32_0 : i32, i32, i32
  }
}

</mosaic_0001>

<llo_original>
// kernel: tpu_custom_call.1
$region0: #{tpu_custom_call.1}
  #allocation0 [shape = 'u32[]', space=smem, size = 0x4, offset = 0x4, fixed_abs, tag = 'smem constant byte address 0x4 - core index']
  #allocation1 [shape = 'u32[72,128]{1,0:T(1,128)}', space=vmem, size = 0x9000, scoped, tag = 'internal scratch']
  #allocation2 [shape = 'f32[4,4]{1,0:T(4,128)}', space=vmem, size = 0x800, scoped, tag = 'scratch operand']
  %s0 = inlined_call_operand.hbm [shape: f32[2,4,256], index: 0, kind: input, shape index: {}]
  %s1 = inlined_call_operand.hbm [shape: f32[2,4,4], index: 1, kind: output, shape index: {}]
  %s2 = sld [smem:[#allocation0]]
  $region49: #{tpu_custom_call.1} parent=0
    _
  %s4 = ssub.s32 1, %s2
  %s5 = scalar_select 0, %s4, %s2
  $region1: #{tpu_custom_call.1} parent=0
    #allocation3 [shape = 'u8[8192]{0}', space=vmem, size = 0x2000, scoped, tag = 'input window, operand 0']
    #allocation4 [shape = 's32[2]{0}', space=sflag, size = 0x8, scoped, tag = 'scoped memory for tpu_custom_call.1']
    #allocation5 [shape = 's32[2]{0}', space=sflag, size = 0x8, scoped, tag = 'scoped memory for tpu_custom_call.1']
    #allocation6 [shape = 'u8[4096]{0}', space=vmem, size = 0x1000, scoped, tag = 'output window, operand 0']
    %6 = vsyncpa [#allocation4], 0
    %s7 = scalar_lea.sflag [#allocation4], 1
    %8 = vsyncpa %s7, 0
    %9 = vsyncpa [#allocation5], 0
    %s10 = scalar_lea.sflag [#allocation5], 1
    %11 = vsyncpa %s10, 0
    loop: start=0, step=1, limit=4
    $region2: #{tpu_custom_call.1} parent=1 // loop_pre_header
      _
    $region3: #{tpu_custom_call.1} parent=1 // loop_header
      %s13 = sphi 0, %s17
      %p14 = scmp.ge.s32.totalorder %s13, 4
      %s20 = sphi 0, %s32
      %s21 = sphi 0, %s28
      %s22 = sphi 0, %s20
      %s23 = sphi 0, %s21
      %s24 = sphi 0, %s22
      %s25 = sphi 0, %s23
      %s37 = sphi 0, %s39
      %s40 = sphi 0, %s37
      %s41 = sphi 0, %s40
      %s57 = sphi 0, %s41
      %s63 = sphi 0, %s65
      %s66 = sphi 0, %s63
      %s67 = sphi 0, %s66
      %s83 = sphi 0, %s67
    $region4: #{tpu_custom_call.1} parent=1 // loop_header_branch
      %16 = sbr.rel (%p14) target = $region8
    $region5: #{tpu_custom_call.1} parent=1 // loop_body
      %s18 = ssub.s32 %s13, 1
      %s19 = ssub.s32 %s13, 2
      %s26 = sadd.s32 1, %s21
      %p27 = scmp.ge.s32.totalorder %s26, 1
      %s28 = scalar_select %p27, 0, %s26
      %s29 = sadd.s32 1, %s20
      %s30 = scalar_select %p27, %s29, %s20
      %p31 = scmp.ge.s32.totalorder %s30, 2
      %s32 = scalar_select %p31, 0, %s30
      %s33 = ssub.s32 %s20, %s32
      %s34 = ssub.s32 %s21, %s28
      %s35 = sor.u32 %s33, %s34
      %p36 = scmp.eq.s32.totalorder %s35, 0
      %s38 = sadd.s32 %s37, 1
      %s39 = scalar_select %p36, %s37, %s38
      %p42 = pneg %p36
      %p43 = scmp.eq.s32.totalorder %s13, 1
      %p44 = por %p42, %p43
      %p45 = scmp.ne.s32.totalorder %s37, %s40
      %p46 = scmp.eq.s32.totalorder %s13, 0
      %p47 = por %p45, %p46
      %p48 = scmp.ne.s32.totalorder %s37, %s40
      %p49 = scmp.eq.s32.totalorder %s18, 1
      %p50 = por %p48, %p49
      %p51 = scmp.ne.s32.totalorder %s40, %s41
      %p52 = scmp.eq.s32.totalorder %s18, 0
      %p53 = por %p51, %p52
      %p54 = scmp.ne.s32.totalorder %s40, %s41
      %p55 = scmp.eq.s32.totalorder %s19, 1
      %p56 = por %p54, %p55
      %p58 = scmp.ne.s32.totalorder %s41, %s57
      %p59 = scmp.eq.s32.totalorder %s19, 0
      %p60 = por %p58, %p59
      %s61 = ssub.s32 %s20, %s32
      %p62 = scmp.eq.s32.totalorder %s61, 0
      %s64 = sadd.s32 %s63, 1
      %s65 = scalar_select %p62, %s63, %s64
      %p68 = pneg %p62
      %p69 = scmp.eq.s32.totalorder %s13, 1
      %p70 = por %p68, %p69
      %p71 = scmp.ne.s32.totalorder %s63, %s66
      %p72 = scmp.eq.s32.totalorder %s13, 0
      %p73 = por %p71, %p72
      %p74 = scmp.ne.s32.totalorder %s63, %s66
      %p75 = scmp.eq.s32.totalorder %s18, 1
      %p76 = por %p74, %p75
      %p77 = scmp.ne.s32.totalorder %s66, %s67
      %p78 = scmp.eq.s32.totalorder %s18, 0
      %p79 = por %p77, %p78
      %p80 = scmp.ne.s32.totalorder %s66, %s67
      %p81 = scmp.eq.s32.totalorder %s19, 1
      %p82 = por %p80, %p81
      %p84 = scmp.ne.s32.totalorder %s67, %s83
      %p85 = scmp.eq.s32.totalorder %s19, 0
      %p86 = por %p84, %p85
      %p87 = scmp.le.s32.totalorder 1, %s13
      %p88 = scmp.lt.s32.totalorder %s13, 3
      %p89 = pnand %p87, %p88
      %p90 = pneg %p89
      // Predicated region
      $region9: #{tpu_custom_call.1} parent=5 // pred_check
        _
      $region10: #{tpu_custom_call.1} parent=5 // pred_check_branch
        %92 = sbr.rel (%p89) target = $region12
      $region11: #{tpu_custom_call.1} parent=5 // pred_region
        %s93 = ssub.s32 %s13, 1
      $region12: #{tpu_custom_call.1} parent=5 // pred_fallthru
        _
      %p94 = scmp.lt.s32.totalorder %s13, 2
      // Predicated region
      $region13: #{tpu_custom_call.1} parent=5 // pred_check
        %p95 = pneg %p94
      $region14: #{tpu_custom_call.1} parent=5 // pred_check_branch
        %97 = sbr.rel (%p95) target = $region16
      $region15: #{tpu_custom_call.1} parent=5 // pred_region
        // Predicated region
        $region17: #{tpu_custom_call.1} parent=15 // pred_check
          %p98 = pneg %p47
        $region18: #{tpu_custom_call.1} parent=15 // pred_check_branch
          %100 = sbr.rel (%p98) target = $region20
        $region19: #{tpu_custom_call.1} parent=15 // pred_region
          %s101 = sand.u32 %s37, 1
          %s102 = scalar_lea.sflag [#allocation4], %s101
          %s103 = sand.u32 %s37, 1
          %s104 = smul.addr %s103, 8
          %s105 = scalar_lea.vmem [#allocation3], %s104
          %s106 = smul.u32 2, %s21
          %108 = vsyncadd %s102, 0
          %s109 = smul.addr %s20, 2
          %s110 = sadd.s32 %s106, %s109
          %s111 = smul.addr %s110, 4
          %s112 = scalar_lea.hbm %s0, %s111
          %s114 = sshll.u32 %s112, 4
          %s115 = int_to_ptr.hbm [resolvable:$true] %s114
          %s116 = sshll.u32 %s105, 4
          %s117 = int_to_ptr.vmem [resolvable:$true] %s116
          %119 = dma.hbm_to_vmem [thread:$0]  %s115, 128, %s117, %s102
        $region20: #{tpu_custom_call.1} parent=15 // pred_fallthru
          _
      $region16: #{tpu_custom_call.1} parent=5 // pred_fallthru
        _
      %p120 = scmp.le.s32.totalorder 1, %s13
      %p121 = scmp.lt.s32.totalorder %s13, 3
      %p122 = pnand %p120, %p121
      %p123 = pneg %p122
      // Predicated region
      $region21: #{tpu_custom_call.1} parent=5 // pred_check
        _
      $region22: #{tpu_custom_call.1} parent=5 // pred_check_branch
        %125 = sbr.rel (%p122) target = $region24
      $region23: #{tpu_custom_call.1} parent=5 // pred_region
        %s126 = ssub.s32 %s13, 1
        %s127 = sand.u32 %s40, 1
        %s128 = scalar_lea.sflag [#allocation4], %s127
        %s129 = sand.u32 %s40, 1
        %s130 = smul.addr %s129, 8
        %s131 = scalar_lea.vmem [#allocation3], %s130
        // Predicated region
        $region25: #{tpu_custom_call.1} parent=23 // pred_check
          %p132 = pneg %p53
        $region26: #{tpu_custom_call.1} parent=23 // pred_check_branch
          %134 = sbr.rel (%p132) target = $region28
        $region27: #{tpu_custom_call.1} parent=23 // pred_region
          %136 = dma.done %s128, 128
        $region28: #{tpu_custom_call.1} parent=23 // pred_fallthru
          _
        %s137 = sand.u32 %s40, 1
        %s138 = scalar_lea.sflag [#allocation4], %s137
        %s139 = sand.u32 %s40, 1
        %s140 = smul.addr %s139, 8
        %s141 = scalar_lea.vmem [#allocation3], %s140
        %p142 = pneg %p53
        %p143 = pneg %p50
        %p144 = pneg %p79
        %p145 = pneg %p76
        %s146 = sand.u32 %s66, 1
        %s147 = scalar_lea.sflag [#allocation5], %s146
        %s148 = sand.u32 %s66, 1
        %s149 = smul.addr %s148, 4
        %s150 = scalar_lea.vmem [#allocation6], %s149
        %s151 = smul.u32 2, %s23
        %p152 = scmp.eq.s32.totalorder %s23, 0
        // Predicated region
        $region29: #{tpu_custom_call.1} parent=23 // pred_check
          %p153 = pneg %p152
        $region30: #{tpu_custom_call.1} parent=23 // pred_check_branch
          %155 = sbr.rel (%p153) target = $region32
        $region31: #{tpu_custom_call.1} parent=23 // pred_region
          %vm156 = vcmask 27648
          %157 = vst.msk [vmem:[#allocation2] sm:$0xf] %vm156, 0.0
        $region32: #{tpu_custom_call.1} parent=23 // pred_fallthru
          _
        %v158 = vld [vmem:[%s131] sm:$0xff]
        %v159 = vld [vmem:[#allocation2] sm:$0xf]
        %161 = vst [vmem:[#allocation1] ss:$2 sm:$0xff] %v158
        %v162 = vld.sshfl [vmem:[#allocation1] sm:$0xff pattern:$0x75316420]
        %v163 = vld.sshfl [vmem:[#allocation1 + $0x8] sm:$0xff pattern:$0x75316420]
        %166 = vst [vmem:[#allocation1] ss:$2 sm:$0xff] %v158
        %v167 = vld.sshfl [vmem:[#allocation1] sm:$0xff pattern:$0x75316420]
        %v168 = vld.sshfl [vmem:[#allocation1 + $0x8] sm:$0xff pattern:$0x75316420]
        %171 = vmatpush.xpose.msra.mxu0 0.0
        %172 = vmatpush.xpose.msra.mxu0 0.0
        %173 = vmatpush.xpose.msra.mxu0 0.0
        %174 = vmatpush.xpose.msra.mxu0 0.0
        %175 = vmatpush.xpose.msra.mxu0 0.0
        %176 = vmatpush.xpose.msra.mxu0 0.0
        %177 = vmatpush.xpose.msra.mxu0 0.0
        %178 = vmatpush.xpose.msra.mxu0 0.0
        %179 = vmatpush.xpose.msra.mxu0 0.0
        %180 = vmatpush.xpose.msra.mxu0 0.0
        %181 = vmatpush.xpose.msra.mxu0 0.0
        %182 = vmatpush.xpose.msra.mxu0 0.0
        %183 = vmatpush.xpose.msra.mxu0 0.0
        %184 = vmatpush.xpose.msra.mxu0 0.0
        %185 = vmatpush.xpose.msra.mxu0 0.0
        %v186 = vand.u32 %v167, 4294901760
        %187 = vmatpush.xpose.msra.mxu0 %v186
        %v188 = vand.u32 %v162, 4294901760
        %v189 = vsub.f32 %v162, %v188
        %v190 = vand.u32 %v189, 4294901760
        %v191 = vsub.f32 %v189, %v190
        %v192 = vand.u32 %v191, 4294901760
        %193 = vmatmul.f32.gmra.mxu0 %v192
        %v194 = vpop.f32.mrf.mxu0
        %v195 = vadd.f32 0.0, %v194
        %196 = vdwg.mxu0
        %197 = vmatpush.xpose.msra.mxu0 0.0
        %198 = vmatpush.xpose.msra.mxu0 0.0
        %199 = vmatpush.xpose.msra.mxu0 0.0
        %200 = vmatpush.xpose.msra.mxu0 0.0
        %201 = vmatpush.xpose.msra.mxu0 0.0
        %202 = vmatpush.xpose.msra.mxu0 0.0
        %203 = vmatpush.xpose.msra.mxu0 0.0
        %204 = vmatpush.xpose.msra.mxu0 0.0
        %205 = vmatpush.xpose.msra.mxu0 0.0
        %206 = vmatpush.xpose.msra.mxu0 0.0
        %207 = vmatpush.xpose.msra.mxu0 0.0
        %208 = vmatpush.xpose.msra.mxu0 0.0
        %209 = vmatpush.xpose.msra.mxu0 0.0
        %210 = vmatpush.xpose.msra.mxu0 0.0
        %211 = vmatpush.xpose.msra.mxu0 0.0
        %v212 = vand.u32 %v167, 4294901760
        %v213 = vsub.f32 %v167, %v212
        %v214 = vand.u32 %v213, 4294901760
        %v215 = vsub.f32 %v213, %v214
        %v216 = vand.u32 %v215, 4294901760
        %217 = vmatpush.xpose.msra.mxu0 %v216
        %v218 = vand.u32 %v162, 4294901760
        %219 = vmatmul.f32.gmra.mxu0 %v218
        %v220 = vpop.f32.mrf.mxu0
        %v221 = vadd.f32 %v195, %v220
        %222 = vdwg.mxu0
        %223 = vmatpush.xpose.msra.mxu0 0.0
        %224 = vmatpush.xpose.msra.mxu0 0.0
        %225 = vmatpush.xpose.msra.mxu0 0.0
        %226 = vmatpush.xpose.msra.mxu0 0.0
        %227 = vmatpush.xpose.msra.mxu0 0.0
        %228 = vmatpush.xpose.msra.mxu0 0.0
        %229 = vmatpush.xpose.msra.mxu0 0.0
        %230 = vmatpush.xpose.msra.mxu0 0.0
        %231 = vmatpush.xpose.msra.mxu0 0.0
        %232 = vmatpush.xpose.msra.mxu0 0.0
        %233 = vmatpush.xpose.msra.mxu0 0.0
        %234 = vmatpush.xpose.msra.mxu0 0.0
        %235 = vmatpush.xpose.msra.mxu0 0.0
        %236 = vmatpush.xpose.msra.mxu0 0.0
        %237 = vmatpush.xpose.msra.mxu0 0.0
        %v238 = vand.u32 %v167, 4294901760
        %v239 = vsub.f32 %v167, %v238
        %240 = vmatpush.xpose.msra.mxu0 %v239
        %v241 = vand.u32 %v162, 4294901760
        %v242 = vsub.f32 %v162, %v241
        %243 = vmatmul.f32.gmra.mxu0 %v242
        %v244 = vpop.f32.mrf.mxu0
        %v245 = vadd.f32 %v221, %v244
        %246 = vdwg.mxu0
        %247 = vmatpush.xpose.msra.mxu0 0.0
        %248 = vmatpush.xpose.msra.mxu0 0.0
        %249 = vmatpush.xpose.msra.mxu0 0.0
        %250 = vmatpush.xpose.msra.mxu0 0.0
        %251 = vmatpush.xpose.msra.mxu0 0.0
        %252 = vmatpush.xpose.msra.mxu0 0.0
        %253 = vmatpush.xpose.msra.mxu0 0.0
        %254 = vmatpush.xpose.msra.mxu0 0.0
        %255 = vmatpush.xpose.msra.mxu0 0.0
        %256 = vmatpush.xpose.msra.mxu0 0.0
        %257 = vmatpush.xpose.msra.mxu0 0.0
        %258 = vmatpush.xpose.msra.mxu0 0.0
        %259 = vmatpush.xpose.msra.mxu0 0.0
        %260 = vmatpush.xpose.msra.mxu0 0.0
        %261 = vmatpush.xpose.msra.mxu0 0.0
        %v262 = vand.u32 %v167, 4294901760
        %263 = vmatpush.xpose.msra.mxu0 %v262
        %v264 = vand.u32 %v162, 4294901760
        %v265 = vsub.f32 %v162, %v264
        %v266 = vand.u32 %v265, 4294901760
        %267 = vmatmul.f32.gmra.mxu0 %v266
        %v268 = vpop.f32.mrf.mxu0
        %v269 = vadd.f32 %v245, %v268
        %270 = vdwg.mxu0
        %271 = vmatpush.xpose.msra.mxu0 0.0
        %272 = vmatpush.xpose.msra.mxu0 0.0
        %273 = vmatpush.xpose.msra.mxu0 0.0
        %274 = vmatpush.xpose.msra.mxu0 0.0
        %275 = vmatpush.xpose.msra.mxu0 0.0
        %276 = vmatpush.xpose.msra.mxu0 0.0
        %277 = vmatpush.xpose.msra.mxu0 0.0
        %278 = vmatpush.xpose.msra.mxu0 0.0
        %279 = vmatpush.xpose.msra.mxu0 0.0
        %280 = vmatpush.xpose.msra.mxu0 0.0
        %281 = vmatpush.xpose.msra.mxu0 0.0
        %282 = vmatpush.xpose.msra.mxu0 0.0
        %283 = vmatpush.xpose.msra.mxu0 0.0
        %284 = vmatpush.xpose.msra.mxu0 0.0
        %285 = vmatpush.xpose.msra.mxu0 0.0
        %v286 = vand.u32 %v167, 4294901760
        %v287 = vsub.f32 %v167, %v286
        %v288 = vand.u32 %v287, 4294901760
        %289 = vmatpush.xpose.msra.mxu0 %v288
        %v290 = vand.u32 %v162, 4294901760
        %291 = vmatmul.f32.gmra.mxu0 %v290
        %v292 = vpop.f32.mrf.mxu0
        %v293 = vadd.f32 %v269, %v292
        %294 = vdwg.mxu0
        %295 = vmatpush.xpose.msra.mxu0 0.0
        %296 = vmatpush.xpose.msra.mxu0 0.0
        %297 = vmatpush.xpose.msra.mxu0 0.0
        %298 = vmatpush.xpose.msra.mxu0 0.0
        %299 = vmatpush.xpose.msra.mxu0 0.0
        %300 = vmatpush.xpose.msra.mxu0 0.0
        %301 = vmatpush.xpose.msra.mxu0 0.0
        %302 = vmatpush.xpose.msra.mxu0 0.0
        %303 = vmatpush.xpose.msra.mxu0 0.0
        %304 = vmatpush.xpose.msra.mxu0 0.0
        %305 = vmatpush.xpose.msra.mxu0 0.0
        %306 = vmatpush.xpose.msra.mxu0 0.0
        %307 = vmatpush.xpose.msra.mxu0 0.0
        %308 = vmatpush.xpose.msra.mxu0 0.0
        %309 = vmatpush.xpose.msra.mxu0 0.0
        %v310 = vand.u32 %v167, 4294901760
        %311 = vmatpush.xpose.msra.mxu0 %v310
        %v312 = vand.u32 %v162, 4294901760
        %313 = vmatmul.f32.gmra.mxu0 %v312
        %v314 = vpop.f32.mrf.mxu0
        %v315 = vadd.f32 %v293, %v314
        %316 = vdwg.mxu0
        %317 = vmatpush.xpose.msra.mxu0 0.0
        %318 = vmatpush.xpose.msra.mxu0 0.0
        %319 = vmatpush.xpose.msra.mxu0 0.0
        %320 = vmatpush.xpose.msra.mxu0 0.0
        %321 = vmatpush.xpose.msra.mxu0 0.0
        %322 = vmatpush.xpose.msra.mxu0 0.0
        %323 = vmatpush.xpose.msra.mxu0 0.0
        %324 = vmatpush.xpose.msra.mxu0 0.0
        %325 = vmatpush.xpose.msra.mxu0 0.0
        %326 = vmatpush.xpose.msra.mxu0 0.0
        %327 = vmatpush.xpose.msra.mxu0 0.0
        %328 = vmatpush.xpose.msra.mxu0 0.0
        %329 = vmatpush.xpose.msra.mxu0 0.0
        %330 = vmatpush.xpose.msra.mxu0 0.0
        %331 = vmatpush.xpose.msra.mxu0 0.0
        %v332 = vand.u32 %v168, 4294901760
        %333 = vmatpush.xpose.msra.mxu0 %v332
        %v334 = vand.u32 %v163, 4294901760
        %v335 = vsub.f32 %v163, %v334
        %v336 = vand.u32 %v335, 4294901760
        %v337 = vsub.f32 %v335, %v336
        %v338 = vand.u32 %v337, 4294901760
        %339 = vmatmul.f32.gmra.mxu0 %v338
        %v340 = vpop.f32.mrf.mxu0
        %v341 = vadd.f32 %v315, %v340
        %342 = vdwg.mxu0
        %343 = vmatpush.xpose.msra.mxu0 0.0
        %344 = vmatpush.xpose.msra.mxu0 0.0
        %345 = vmatpush.xpose.msra.mxu0 0.0
        %346 = vmatpush.xpose.msra.mxu0 0.0
        %347 = vmatpush.xpose.msra.mxu0 0.0
        %348 = vmatpush.xpose.msra.mxu0 0.0
        %349 = vmatpush.xpose.msra.mxu0 0.0
        %350 = vmatpush.xpose.msra.mxu0 0.0
        %351 = vmatpush.xpose.msra.mxu0 0.0
        %352 = vmatpush.xpose.msra.mxu0 0.0
        %353 = vmatpush.xpose.msra.mxu0 0.0
        %354 = vmatpush.xpose.msra.mxu0 0.0
        %355 = vmatpush.xpose.msra.mxu0 0.0
        %356 = vmatpush.xpose.msra.mxu0 0.0
        %357 = vmatpush.xpose.msra.mxu0 0.0
        %v358 = vand.u32 %v168, 4294901760
        %v359 = vsub.f32 %v168, %v358
        %v360 = vand.u32 %v359, 4294901760
        %v361 = vsub.f32 %v359, %v360
        %v362 = vand.u32 %v361, 4294901760
        %363 = vmatpush.xpose.msra.mxu0 %v362
        %v364 = vand.u32 %v163, 4294901760
        %365 = vmatmul.f32.gmra.mxu0 %v364
        %v366 = vpop.f32.mrf.mxu0
        %v367 = vadd.f32 %v341, %v366
        %368 = vdwg.mxu0
        %369 = vmatpush.xpose.msra.mxu0 0.0
        %370 = vmatpush.xpose.msra.mxu0 0.0
        %371 = vmatpush.xpose.msra.mxu0 0.0
        %372 = vmatpush.xpose.msra.mxu0 0.0
        %373 = vmatpush.xpose.msra.mxu0 0.0
        %374 = vmatpush.xpose.msra.mxu0 0.0
        %375 = vmatpush.xpose.msra.mxu0 0.0
        %376 = vmatpush.xpose.msra.mxu0 0.0
        %377 = vmatpush.xpose.msra.mxu0 0.0
        %378 = vmatpush.xpose.msra.mxu0 0.0
        %379 = vmatpush.xpose.msra.mxu0 0.0
        %380 = vmatpush.xpose.msra.mxu0 0.0
        %381 = vmatpush.xpose.msra.mxu0 0.0
        %382 = vmatpush.xpose.msra.mxu0 0.0
        %383 = vmatpush.xpose.msra.mxu0 0.0
        %v384 = vand.u32 %v168, 4294901760
        %v385 = vsub.f32 %v168, %v384
        %386 = vmatpush.xpose.msra.mxu0 %v385
        %v387 = vand.u32 %v163, 4294901760
        %v388 = vsub.f32 %v163, %v387
        %389 = vmatmul.f32.gmra.mxu0 %v388
        %v390 = vpop.f32.mrf.mxu0
        %v391 = vadd.f32 %v367, %v390
        %392 = vdwg.mxu0
        %393 = vmatpush.xpose.msra.mxu0 0.0
        %394 = vmatpush.xpose.msra.mxu0 0.0
        %395 = vmatpush.xpose.msra.mxu0 0.0
        %396 = vmatpush.xpose.msra.mxu0 0.0
        %397 = vmatpush.xpose.msra.mxu0 0.0
        %398 = vmatpush.xpose.msra.mxu0 0.0
        %399 = vmatpush.xpose.msra.mxu0 0.0
        %400 = vmatpush.xpose.msra.mxu0 0.0
        %401 = vmatpush.xpose.msra.mxu0 0.0
        %402 = vmatpush.xpose.msra.mxu0 0.0
        %403 = vmatpush.xpose.msra.mxu0 0.0
        %404 = vmatpush.xpose.msra.mxu0 0.0
        %405 = vmatpush.xpose.msra.mxu0 0.0
        %406 = vmatpush.xpose.msra.mxu0 0.0
        %407 = vmatpush.xpose.msra.mxu0 0.0
        %v408 = vand.u32 %v168, 4294901760
        %409 = vmatpush.xpose.msra.mxu0 %v408
        %v410 = vand.u32 %v163, 4294901760
        %v411 = vsub.f32 %v163, %v410
        %v412 = vand.u32 %v411, 4294901760
        %413 = vmatmul.f32.gmra.mxu0 %v412
        %v414 = vpop.f32.mrf.mxu0
        %v415 = vadd.f32 %v391, %v414
        %416 = vdwg.mxu0
        %417 = vmatpush.xpose.msra.mxu0 0.0
        %418 = vmatpush.xpose.msra.mxu0 0.0
        %419 = vmatpush.xpose.msra.mxu0 0.0
        %420 = vmatpush.xpose.msra.mxu0 0.0
        %421 = vmatpush.xpose.msra.mxu0 0.0
        %422 = vmatpush.xpose.msra.mxu0 0.0
        %423 = vmatpush.xpose.msra.mxu0 0.0
        %424 = vmatpush.xpose.msra.mxu0 0.0
        %425 = vmatpush.xpose.msra.mxu0 0.0
        %426 = vmatpush.xpose.msra.mxu0 0.0
        %427 = vmatpush.xpose.msra.mxu0 0.0
        %428 = vmatpush.xpose.msra.mxu0 0.0
        %429 = vmatpush.xpose.msra.mxu0 0.0
        %430 = vmatpush.xpose.msra.mxu0 0.0
        %431 = vmatpush.xpose.msra.mxu0 0.0
        %v432 = vand.u32 %v168, 4294901760
        %v433 = vsub.f32 %v168, %v432
        %v434 = vand.u32 %v433, 4294901760
        %435 = vmatpush.xpose.msra.mxu0 %v434
        %v436 = vand.u32 %v163, 4294901760
        %437 = vmatmul.f32.gmra.mxu0 %v436
        %v438 = vpop.f32.mrf.mxu0
        %v439 = vadd.f32 %v415, %v438
        %440 = vdwg.mxu0
        %441 = vmatpush.xpose.msra.mxu0 0.0
        %442 = vmatpush.xpose.msra.mxu0 0.0
        %443 = vmatpush.xpose.msra.mxu0 0.0
        %444 = vmatpush.xpose.msra.mxu0 0.0
        %445 = vmatpush.xpose.msra.mxu0 0.0
        %446 = vmatpush.xpose.msra.mxu0 0.0
        %447 = vmatpush.xpose.msra.mxu0 0.0
        %448 = vmatpush.xpose.msra.mxu0 0.0
        %449 = vmatpush.xpose.msra.mxu0 0.0
        %450 = vmatpush.xpose.msra.mxu0 0.0
        %451 = vmatpush.xpose.msra.mxu0 0.0
        %452 = vmatpush.xpose.msra.mxu0 0.0
        %453 = vmatpush.xpose.msra.mxu0 0.0
        %454 = vmatpush.xpose.msra.mxu0 0.0
        %455 = vmatpush.xpose.msra.mxu0 0.0
        %v456 = vand.u32 %v168, 4294901760
        %457 = vmatpush.xpose.msra.mxu0 %v456
        %v458 = vand.u32 %v163, 4294901760
        %459 = vmatmul.f32.gmra.mxu0 %v458
        %v460 = vpop.f32.mrf.mxu0
        %v461 = vadd.f32 %v439, %v460
        %462 = vdwg.mxu0
        %v463 = vadd.f32 %v159, %v461
        %vm464 = vcmask 27648
        %465 = vst.msk [vmem:[#allocation2] sm:$0xf] %vm464, %v463
        // Predicated region
        $region33: #{tpu_custom_call.1} parent=23 // pred_check
          %p466 = pneg %p152
        $region34: #{tpu_custom_call.1} parent=23 // pred_check_branch
          %468 = sbr.rel (%p466) target = $region36
        $region35: #{tpu_custom_call.1} parent=23 // pred_region
          %v469 = vld [vmem:[#allocation2] sm:$0xf]
          %v470 = vsel %vm464, %v469, inf
          %471 = vmin.xlane.f32.xlu0 %v470
          %v472 = vpop.xlane.xlu0 %471
          %v473 = vsub.f32 %v472, %v469
          %v474 = vmul.f32 %v473, 1.442695
          %v475 = vpow.pop %v474
          %v476 = vsel %vm464, %v475, 0.0
          %477 = vadd.xlane.f32.xlu0 %v476
          %v478 = vpop.xlane.xlu0 %477
          %v479 = vrcp.pop %v478
          %v480 = vmul.f32 %v478, %v479
          %v481 = vsub.f32 1.0, %v480
          %v482 = vmul.f32 %v479, %v481
          %v483 = vadd.f32 %v479, %v482
          %vm484 = vweird.f32 %v478
          %vm485 = vweird.f32 %v479
          %vm486 = vmor %vm484, %vm485
          %v487 = vsel %vm486, %v479, %v483
          %v488 = vand.u32 2147483647, %v478
          %vm489 = vcmp.eq.f32.partialorder %v488, 8.507059e+37
          %v490 = vand.u32 %v478, 2147483648
          %v491 = vor.u32 1.1754944e-38, %v490
          %v492 = vsel %vm489, %v491, %v487
          %v493 = vmul.f32 %v475, %v492
          %494 = vst.msk [vmem:[%s150] sm:$0xf] %vm464, %v493
        $region36: #{tpu_custom_call.1} parent=23 // pred_fallthru
          _
        %s495 = sand.u32 %s66, 1
        %s496 = scalar_lea.sflag [#allocation5], %s495
        %s497 = sand.u32 %s66, 1
        %s498 = smul.addr %s497, 4
        %s499 = scalar_lea.vmem [#allocation6], %s498
        // Predicated region
        $region37: #{tpu_custom_call.1} parent=23 // pred_check
          %p500 = pneg %p76
        $region38: #{tpu_custom_call.1} parent=23 // pred_check_branch
          %502 = sbr.rel (%p500) target = $region40
        $region39: #{tpu_custom_call.1} parent=23 // pred_region
          %504 = vsyncadd %s496, 0
          %s505 = smul.addr %s22, 4
          %s506 = scalar_lea.hbm %s1, %s505
          %s508 = sshll.u32 %s499, 4
          %s509 = int_to_ptr.vmem [resolvable:$true] %s508
          %s510 = sshll.u32 %s506, 4
          %s511 = int_to_ptr.hbm [resolvable:$true] %s510
          %513 = dma.vmem_to_hbm [thread:$0]  %s509, 64, %s511, %s496
        $region40: #{tpu_custom_call.1} parent=23 // pred_fallthru
          _
      $region24: #{tpu_custom_call.1} parent=5 // pred_fallthru
        _
      %p514 = scmp.le.s32.totalorder 2, %s13
      // Predicated region
      $region41: #{tpu_custom_call.1} parent=5 // pred_check
        %p515 = pneg %p514
      $region42: #{tpu_custom_call.1} parent=5 // pred_check_branch
        %517 = sbr.rel (%p515) target = $region44
      $region43: #{tpu_custom_call.1} parent=5 // pred_region
        %s518 = ssub.s32 %s13, 2
        // Predicated region
        $region45: #{tpu_custom_call.1} parent=43 // pred_check
          %p519 = pneg %p82
        $region46: #{tpu_custom_call.1} parent=43 // pred_check_branch
          %521 = sbr.rel (%p519) target = $region48
        $region47: #{tpu_custom_call.1} parent=43 // pred_region
          %s522 = sand.u32 %s67, 1
          %s523 = scalar_lea.sflag [#allocation5], %s522
          %s524 = sand.u32 %s67, 1
          %s525 = smul.addr %s524, 4
          %s526 = scalar_lea.vmem [#allocation6], %s525
          %528 = dma.done %s523, 64
        $region48: #{tpu_custom_call.1} parent=43 // pred_fallthru
          _
      $region44: #{tpu_custom_call.1} parent=5 // pred_fallthru
        _
    $region6: #{tpu_custom_call.1} parent=1 // loop_footer
      %s17 = sadd.s32 1, %s13
    $region7: #{tpu_custom_call.1} parent=1 // loop_footer_branch
      %12 = sbr.rel target = $region3
    $region8: #{tpu_custom_call.1} parent=1 // loop_exit
      _
    %529 = vsyncpa [#allocation4], 1
    %s530 = scalar_lea.sflag [#allocation4], 1
    %531 = vsyncpa %s530, 1
    %532 = vsyncpa [#allocation5], 1
    %s533 = scalar_lea.sflag [#allocation5], 1
    %534 = vsyncpa %s533, 1

</llo_original>
